<compile_context>
chip_gen: v5e
topology: v5e:2x2
jax: 0.10.0
libtpu: 0.0.40
codegen_flags: <defaults>
</compile_context>

<pallas_src>
import jax
import jax.numpy as jnp
from jax import lax
from jax.experimental import pallas as pl
from jax.experimental.pallas import tpu as pltpu


# ----------------------------- fused QKV projection -----------------------------

def _make_qkv_kernel(hidden_dim):
    def qkv_kernel(x_ref, w_ref, q_ref, k_ref, v_ref):
        # x_ref: (TM, K)   w_ref: (K, 2*hidden + C)
        # One MXU dot, three lane-dense stores (q / k / v emitted separately).
        acc = jnp.dot(x_ref[...], w_ref[...], preferred_element_type=jnp.float32)
        q_ref[...] = acc[:, :hidden_dim].astype(q_ref.dtype)
        k_ref[...] = acc[:, hidden_dim:2 * hidden_dim].astype(k_ref.dtype)
        v_ref[...] = acc[:, 2 * hidden_dim:].astype(v_ref.dtype)
    return qkv_kernel


def qkv_projection(x2d, w_cat, hidden_dim, c_out, *, tm=256, out_dtype=None):
    """(q, k, v) = split(x @ [w_q | w_k | w_v]); one read of x per tile, no bias."""
    M, K = x2d.shape
    n_cat = w_cat.shape[1]
    out_dtype = out_dtype or x2d.dtype
    tm = min(tm, M)
    grid = (pl.cdiv(M, tm),)
    return pl.pallas_call(
        _make_qkv_kernel(hidden_dim),
        out_shape=(jax.ShapeDtypeStruct((M, hidden_dim), out_dtype),
                   jax.ShapeDtypeStruct((M, hidden_dim), out_dtype),
                   jax.ShapeDtypeStruct((M, c_out), out_dtype)),
        grid=grid,
        in_specs=[
            pl.BlockSpec((tm, K), lambda i: (i, 0)),
            pl.BlockSpec((K, n_cat), lambda i: (0, 0)),
        ],
        out_specs=(pl.BlockSpec((tm, hidden_dim), lambda i: (i, 0)),
                   pl.BlockSpec((tm, hidden_dim), lambda i: (i, 0)),
                   pl.BlockSpec((tm, c_out), lambda i: (i, 0))),
        compiler_params=pltpu.CompilerParams(
            dimension_semantics=("parallel",),
            vmem_limit_bytes=64 * 1024 * 1024),
    )(x2d, w_cat)


# ----------------------------- attention core (+ fused output projection) -----------------------------

def _make_attn_kernel(num_heads, head_dim, v_head_dim, scale):
    def attn_kernel(q_ref, k_ref, v_ref, mrow_ref, mcol_ref, wproj_ref, bproj_ref,
                    o_ref, head_acc):
        # q_ref: (TQ, H*Dh)  k_ref: (N, H*Dh)  v_ref: (N, C)
        # mrow_ref: (1, N)   mcol_ref: (TQ, 1)
        # wproj_ref: (C, C)  bproj_ref: (1, C)
        # o_ref: (TQ, C)     head_acc: VMEM (TQ, C) f32 scratch
        q = q_ref[...].astype(jnp.float32) * jnp.float32(scale)   # fold scale once
        k = k_ref[...].astype(jnp.float32)

        # Mask outer product + compare, hoisted out of the head loop.
        masked = (mcol_ref[...].astype(jnp.float32)
                  * mrow_ref[...].astype(jnp.float32)) == 0.0      # (TQ, N) bool
        neg = jnp.float32(-60000.0)

        for h in range(num_heads):                       # static lane slices
            qh = q[:, h * head_dim:(h + 1) * head_dim]
            kh = k[:, h * head_dim:(h + 1) * head_dim]
            vh = v_ref[:, h * v_head_dim:(h + 1) * v_head_dim]
            # contract last dims of both operands: no k transpose / XLU traffic.
            s = lax.dot_general(qh, kh, (((1,), (1,)), ((), ())),
                                preferred_element_type=jnp.float32)
            s = jnp.where(masked, neg, s)                # exact masked_fill
            s = s - jnp.max(s, axis=-1, keepdims=True)   # stable softmax
            p = jnp.exp(s)
            inv = pl.reciprocal(jnp.sum(p, axis=-1, keepdims=True), approx=True)
            p = p * inv
            # Write this head's PV straight into its lane slice of the scratch
            # (no concatenate; single dense output store below).
            head_acc[:, h * v_head_dim:(h + 1) * v_head_dim] = jnp.dot(
                p.astype(vh.dtype), vh, preferred_element_type=jnp.float32)

        # Fused output projection; w_proj / b_proj stay VMEM-resident across grid.
        proj = jnp.dot(head_acc[...].astype(wproj_ref.dtype), wproj_ref[...],
                       preferred_element_type=jnp.float32)
        o_ref[...] = (proj + bproj_ref[...].astype(jnp.float32)).astype(o_ref.dtype)
    return attn_kernel


def attention_core_pallas(q, k, v, mrow, mcol, w_proj, b_proj, *,
                          num_heads, head_dim, v_head_dim, scale, tq=256,
                          out_dtype=None):
    """q,k: (B,N,H*Dh), v: (B,N,C), mrow: (B,1,N), mcol: (B,N,1) -> (B,N,C) (projected)."""
    B, N, hidden = q.shape
    C = v.shape[-1]
    out_dtype = out_dtype or q.dtype
    tq = min(tq, N)
    grid = (B, pl.cdiv(N, tq))
    return pl.pallas_call(
        _make_attn_kernel(num_heads, head_dim, v_head_dim, scale),
        out_shape=jax.ShapeDtypeStruct((B, N, C), out_dtype),
        grid=grid,
        in_specs=[
            pl.BlockSpec((None, tq, hidden), lambda b, qi: (b, qi, 0)),   # q tile
            pl.BlockSpec((None, N, hidden), lambda b, qi: (b, 0, 0)),     # full K
            pl.BlockSpec((None, N, C), lambda b, qi: (b, 0, 0)),          # full V
            pl.BlockSpec((None, 1, N), lambda b, qi: (b, 0, 0)),          # mask row
            pl.BlockSpec((None, tq, 1), lambda b, qi: (b, qi, 0)),        # mask col
            pl.BlockSpec((C, C), lambda b, qi: (0, 0)),                   # w_proj
            pl.BlockSpec((1, C), lambda b, qi: (0, 0)),                   # b_proj
        ],
        out_specs=pl.BlockSpec((None, tq, C), lambda b, qi: (b, qi, 0)),
        scratch_shapes=[pltpu.VMEM((tq, C), jnp.float32)],
        compiler_params=pltpu.CompilerParams(
            dimension_semantics=("parallel", "parallel"),
            # TODO(synk): re-derive this budget for v7x (64 MiB physical VMEM).
            vmem_limit_bytes=64 * 1024 * 1024),
    )(q, k, v, mrow, mcol, w_proj, b_proj)


# ----------------------------- module wrapper -----------------------------

def attention_forward(params, x, mask, *, num_heads, hidden_dim, tq=256, tm=256):
    """Pallas implementation of Attention.forward.  x: (B, N, C), mask: (B, N)."""
    B, N, C = x.shape
    head_dim = hidden_dim // num_heads
    v_head_dim = C // num_heads
    scale = head_dim ** (-0.5)

    x2d = x.reshape(B * N, C)

    # One fused projection dot against [w_q | w_k | w_v]; q/k/v come out as three
    # separate lane-dense arrays (no wrapper-side lane slicing -> no extra HBM passes).
    w_cat = jnp.concatenate([params["w_qk"], params["w_v"]], axis=1)
    q2d, k2d, v2d = qkv_projection(x2d, w_cat, hidden_dim, C, tm=tm)

    q = q2d.reshape(B, N, hidden_dim)
    k = k2d.reshape(B, N, hidden_dim)
    v3 = v2d.reshape(B, N, C)

    # 1-D mask passed as row/column views; the (TQ,N) outer product is built in
    # VMEM inside the kernel (no (B,N,N) HBM array).
    mrow = mask.reshape(B, 1, N).astype(jnp.float32)
    mcol = mask.reshape(B, N, 1).astype(jnp.float32)

    # Attention core with the output projection fused in (attn_drop/proj_drop p=0.0).
    out = attention_core_pallas(q, k, v3, mrow, mcol,
                                params["w_proj"], params["b_proj"],
                                num_heads=num_heads, head_dim=head_dim,
                                v_head_dim=v_head_dim, scale=scale, tq=tq)
    return out


# ----------------------------- reference (pure JAX) -----------------------------

def attention_reference(params, x, mask, *, num_heads, hidden_dim):
    B, N, C = x.shape
    head_dim = hidden_dim // num_heads
    v_head_dim = C // num_heads
    scale = head_dim ** (-0.5)

    qk = (x @ params["w_qk"]).reshape(B, N, 2, num_heads, head_dim).transpose(2, 0, 3, 1, 4)
    q, kk = qk[0], qk[1]
    v = (x @ params["w_v"]).reshape(B, N, num_heads, v_head_dim).transpose(0, 2, 1, 3)
    attn = jnp.einsum("bhnd,bhmd->bhnm", q, kk) * scale
    m2 = (mask[:, :, None] * mask[:, None, :])[:, None]
    attn = jnp.where(m2 == 0.0, -60000.0, attn)
    attn = jax.nn.softmax(attn, axis=-1)
    o = jnp.einsum("bhnm,bhmd->bhnd", attn, v).transpose(0, 2, 1, 3).reshape(B, N, C)
    return o @ params["w_proj"] + params["b_proj"][0]


# ----------------------------- main -----------------------------

if __name__ == "__main__":
    B, N, dim = 2, 8, 32
    hidden_dim, num_heads = 32, 4

    key = jax.random.PRNGKey(0)
    k1, k2, k3, k4, kx, km = jax.random.split(key, 6)

    params = {
        # weights stored as (in, out); equivalent to torch's (out, in) applied as x @ W.T
        "w_qk": (jax.random.normal(k1, (dim, 2 * hidden_dim), jnp.float32) * 0.05),
        "w_v": (jax.random.normal(k2, (dim, dim), jnp.float32) * 0.05),
        "w_proj": (jax.random.normal(k3, (dim, dim), jnp.float32) * 0.05),
        "b_proj": (jax.random.normal(k4, (1, dim), jnp.float32) * 0.05),
    }

    x = jax.random.normal(kx, (B, N, dim), jnp.float32)
    mask = (jax.random.uniform(km, (B, N)) > 0.3).astype(jnp.float32)

    out = attention_forward(params, x, mask, num_heads=num_heads, hidden_dim=hidden_dim)
    out = jax.block_until_ready(out)

    ref = attention_reference(params, x, mask, num_heads=num_heads, hidden_dim=hidden_dim)
    assert out.shape == (B, N, dim)
    # tolerance accounts for the EUP approximate-reciprocal softmax normalization
    assert jnp.allclose(out, ref, atol=2e-3, rtol=2e-3), "mismatch vs reference"

    print("KERNEL_OK")
</pallas_src>

<mosaic_0001>
module attributes {stable_mosaic.version = 11 : i64} {
  func.func @qkv_kernel(%arg0: i32, %arg1: memref<16x32xf32, #tpu.memory_space<vmem>>, %arg2: memref<32x96xf32, #tpu.memory_space<vmem>>, %arg3: memref<16x32xf32, #tpu.memory_space<vmem>>, %arg4: memref<16x32xf32, #tpu.memory_space<vmem>>, %arg5: memref<16x32xf32, #tpu.memory_space<vmem>>) attributes {dimension_semantics = [#tpu.dimension_semantics<parallel>], iteration_bounds = array<i64: 1>, scalar_prefetch = 0 : i64, scratch_operands = 0 : i64, tpu.core_type = #tpu.core_type<tc>, window_params = [{transform_indices = @transform_0, window_bounds = array<i64: 16, 32>}, {pipeline_mode = #tpu.pipeline_mode<synchronous>, transform_indices = @transform_1, window_bounds = array<i64: 32, 96>}, {transform_indices = @transform_2, window_bounds = array<i64: 16, 32>}, {transform_indices = @transform_3, window_bounds = array<i64: 16, 32>}, {transform_indices = @transform_4, window_bounds = array<i64: 16, 32>}]} {
    %c0 = arith.constant 0 : index
    %c0_0 = arith.constant 0 : index
    %0 = vector.load %arg1[%c0, %c0_0] : memref<16x32xf32, #tpu.memory_space<vmem>>, vector<16x32xf32>
    %c0_1 = arith.constant 0 : index
    %c0_2 = arith.constant 0 : index
    %1 = vector.load %arg2[%c0_1, %c0_2] : memref<32x96xf32, #tpu.memory_space<vmem>>, vector<32x96xf32>
    %cst = arith.constant dense<0.000000e+00> : vector<16x96xf32>
    %2 = tpu.matmul %0, %1, %cst {dimension_numbers = #tpu.dot_dimension_numbers<[1], [0], [0], [1], [0, 0, 1, 1], [], []>} : vector<16x32xf32>, vector<32x96xf32>, vector<16x96xf32> -> vector<16x96xf32>
    %3 = vector.extract_strided_slice %2 {offsets = [0, 0], sizes = [16, 32], strides = [1, 1]} : vector<16x96xf32> to vector<16x32xf32>
    %c0_3 = arith.constant 0 : index
    %c0_4 = arith.constant 0 : index
    %4 = vector.load %arg3[%c0_3, %c0_4] : memref<16x32xf32, #tpu.memory_space<vmem>>, vector<16x32xf32>
    tpu.vector_store %arg3[%c0_3, %c0_4], %3 {strides = array<i32>} : memref<16x32xf32, #tpu.memory_space<vmem>>, vector<16x32xf32>,
    %5 = vector.extract_strided_slice %2 {offsets = [0, 32], sizes = [16, 32], strides = [1, 1]} : vector<16x96xf32> to vector<16x32xf32>
    %c0_5 = arith.constant 0 : index
    %c0_6 = arith.constant 0 : index
    %6 = vector.load %arg4[%c0_5, %c0_6] : memref<16x32xf32, #tpu.memory_space<vmem>>, vector<16x32xf32>
    tpu.vector_store %arg4[%c0_5, %c0_6], %5 {strides = array<i32>} : memref<16x32xf32, #tpu.memory_space<vmem>>, vector<16x32xf32>,
    %7 = vector.extract_strided_slice %2 {offsets = [0, 64], sizes = [16, 32], strides = [1, 1]} : vector<16x96xf32> to vector<16x32xf32>
    %c0_7 = arith.constant 0 : index
    %c0_8 = arith.constant 0 : index
    %8 = vector.load %arg5[%c0_7, %c0_8] : memref<16x32xf32, #tpu.memory_space<vmem>>, vector<16x32xf32>
    tpu.vector_store %arg5[%c0_7, %c0_8], %7 {strides = array<i32>} : memref<16x32xf32, #tpu.memory_space<vmem>>, vector<16x32xf32>,
    return
  }
  func.func @transform_0(%arg0: i32) -> (i32, i32) {
    %c0_i32 = arith.constant 0 : i32
    %c0_i32_0 = arith.constant 0 : i32
    return %arg0, %c0_i32 : i32, i32
  }
  func.func @transform_1(%arg0: i32) -> (i32, i32) {
    %c0_i32 = arith.constant 0 : i32
    %c0_i32_0 = arith.constant 0 : i32
    %c0_i32_1 = arith.constant 0 : i32
    return %c0_i32, %c0_i32_0 : i32, i32
  }
  func.func @transform_2(%arg0: i32) -> (i32, i32) {
    %c0_i32 = arith.constant 0 : i32
    %c0_i32_0 = arith.constant 0 : i32
    return %arg0, %c0_i32 : i32, i32
  }
  func.func @transform_3(%arg0: i32) -> (i32, i32) {
    %c0_i32 = arith.constant 0 : i32
    %c0_i32_0 = arith.constant 0 : i32
    return %arg0, %c0_i32 : i32, i32
  }
  func.func @transform_4(%arg0: i32) -> (i32, i32) {
    %c0_i32 = arith.constant 0 : i32
    %c0_i32_0 = arith.constant 0 : i32
    return %arg0, %c0_i32 : i32, i32
  }
}

</mosaic_0001>

<llo_original>
// kernel: tpu_custom_call.1
$region0: #{tpu_custom_call.1}
  #allocation0 [shape = 'u32[]', space=smem, size = 0x4, offset = 0x4, fixed_abs, tag = 'smem constant byte address 0x4 - core index']
  #allocation1 [shape = 'u32[72,128]{1,0:T(1,128)}', space=vmem, size = 0x9000, scoped, tag = 'internal scratch']
  %s0 = inlined_call_operand.hbm [shape: f32[16,32], index: 0, kind: input, shape index: {}]
  %s1 = inlined_call_operand.hbm [shape: f32[32,96], index: 1, kind: input, shape index: {}]
  %s2 = inlined_call_operand.hbm [shape: f32[16,32], index: 2, kind: output, shape index: {0}]
  %s3 = inlined_call_operand.hbm [shape: f32[16,32], index: 3, kind: output, shape index: {1}]
  %s4 = inlined_call_operand.hbm [shape: f32[16,32], index: 4, kind: output, shape index: {2}]
  %5 = xla_tuple %s2, %s3, %s4
  %s6 = sld [smem:[#allocation0]]
  $region42: #{tpu_custom_call.1} parent=0
    _
  %s8 = ssub.s32 1, %s6
  %s9 = scalar_select 0, %s8, %s6
  $region1: #{tpu_custom_call.1} parent=0
    #allocation2 [shape = 'u8[8192]{0}', space=vmem, size = 0x2000, scoped, tag = 'input window, operand 0, single buffered']
    #allocation3 [shape = 's32[1]{0}', space=sflag, size = 0x4, scoped, tag = 'scoped memory for tpu_custom_call.1']
    #allocation4 [shape = 's32[1]{0}', space=sflag, size = 0x4, scoped, tag = 'scoped memory for tpu_custom_call.1']
    #allocation5 [shape = 'u8[16384]{0}', space=vmem, size = 0x4000, scoped, tag = 'input window, operand 1, single buffered']
    #allocation6 [shape = 's32[1]{0}', space=sflag, size = 0x4, scoped, tag = 'scoped memory for tpu_custom_call.1']
    #allocation7 [shape = 'u8[8192]{0}', space=vmem, size = 0x2000, scoped, tag = 'output window, operand 0, single buffered']
    #allocation8 [shape = 'u8[8192]{0}', space=vmem, size = 0x2000, scoped, tag = 'output window, operand 1, single buffered']
    #allocation9 [shape = 's32[1]{0}', space=sflag, size = 0x4, scoped, tag = 'scoped memory for tpu_custom_call.1']
    #allocation10 [shape = 'u8[8192]{0}', space=vmem, size = 0x2000, scoped, tag = 'output window, operand 2, single buffered']
    %10 = vsyncpa [#allocation3], 0
    %11 = vsyncpa [#allocation6], 0
    %12 = vsyncpa [#allocation4], 0
    %13 = vsyncpa [#allocation9], 0
    // Predicated region
    $region2: #{tpu_custom_call.1} parent=1 // pred_check
      _
    $region3: #{tpu_custom_call.1} parent=1 // pred_check_branch
      %15 = sbr.rel (0) target = $region5
    $region4: #{tpu_custom_call.1} parent=1 // pred_region
      %17 = vsyncadd [#allocation3], 0
      %s18 = sshll.u32 %s0, 4
      %s19 = int_to_ptr.hbm [resolvable:$true] %s18
      %s20 = sshll.u32 [#allocation2], 4
      %s21 = int_to_ptr.vmem [resolvable:$true] %s20
      %26 = dma.hbm_to_vmem [thread:$0]  %s19, 256, %s21, [#allocation3], 128, 128, 8
    $region5: #{tpu_custom_call.1} parent=1 // pred_fallthru
      _
    // Predicated region
    $region6: #{tpu_custom_call.1} parent=1 // pred_check
      _
    $region7: #{tpu_custom_call.1} parent=1 // pred_check_branch
      %28 = sbr.rel (0) target = $region9
    $region8: #{tpu_custom_call.1} parent=1 // pred_region
      %30 = vsyncadd [#allocation6], 0
      %s31 = sshll.u32 %s1, 4
      %s32 = int_to_ptr.hbm [resolvable:$true] %s31
      %s33 = sshll.u32 [#allocation5], 4
      %s34 = int_to_ptr.vmem [resolvable:$true] %s33
      %39 = dma.hbm_to_vmem [thread:$0]  %s32, 512, %s34, [#allocation6], 128, 128, 8
    $region9: #{tpu_custom_call.1} parent=1 // pred_fallthru
      _
    // Predicated region
    $region10: #{tpu_custom_call.1} parent=1 // pred_check
      _
    $region11: #{tpu_custom_call.1} parent=1 // pred_check_branch
      %41 = sbr.rel (0) target = $region13
    $region12: #{tpu_custom_call.1} parent=1 // pred_region
      %43 = dma.done [#allocation3], 256
    $region13: #{tpu_custom_call.1} parent=1 // pred_fallthru
      _
    // Predicated region
    $region14: #{tpu_custom_call.1} parent=1 // pred_check
      _
    $region15: #{tpu_custom_call.1} parent=1 // pred_check_branch
      %45 = sbr.rel (0) target = $region17
    $region16: #{tpu_custom_call.1} parent=1 // pred_region
      %47 = dma.done [#allocation6], 512
    $region17: #{tpu_custom_call.1} parent=1 // pred_fallthru
      _
    %v48 = vld [vmem:[#allocation2] sm:$0xff]
    %v49 = vld [vmem:[#allocation2 + $0x8] sm:$0xff]
    %v50 = vld [vmem:[#allocation5] sm:$0xff]
    %v51 = vld [vmem:[#allocation5 + $0x8] sm:$0xff]
    %v52 = vld [vmem:[#allocation5 + $0x10] sm:$0xff]
    %v53 = vld [vmem:[#allocation5 + $0x18] sm:$0xff]
    %vm54 = vcmask 261120
    %v56 = vsel %vm54, %v48, 0
    %v59 = vsel %vm54, %v49, 0
    %61 = vmatpush.msra.mxu0 0.0
    %62 = vmatpush.msra.mxu0 0.0
    %63 = vmatpush.msra.mxu0 0.0
    %64 = vmatpush.msra.mxu0 0.0
    %65 = vmatpush.msra.mxu0 0.0
    %66 = vmatpush.msra.mxu0 0.0
    %67 = vmatpush.msra.mxu0 0.0
    %68 = vmatpush.msra.mxu0 0.0
    %69 = vmatpush.msra.mxu0 0.0
    %70 = vmatpush.msra.mxu0 0.0
    %71 = vmatpush.msra.mxu0 0.0
    %72 = vmatpush.msra.mxu0 0.0
    %73 = vmatpush.msra.mxu0 %v53
    %74 = vmatpush.msra.mxu0 %v52
    %75 = vmatpush.msra.mxu0 %v51
    %76 = vmatpush.msra.mxu0 %v50
    %77 = vmatmul.f32.gmra.mxu0 %v56
    %v78 = vpop.f32.mrf.mxu0
    %v79 = vadd.f32 0.0, %v78
    %80 = vmatmul.f32.gmra.mxu0 %v59
    %v81 = vpop.f32.mrf.mxu0
    %v82 = vadd.f32 0.0, %v81
    %83 = vdwg.mxu0
    %84 = vst.msk [vmem:[#allocation7] sm:$0xff] %vm54, %v79
    %85 = vst.msk [vmem:[#allocation7 + $0x8] sm:$0xff] %vm54, %v82
    %88 = vrot.lane.b32.xlu0 %v79, 96
    %v89 = vpop.permute.xlu0 %88
    %90 = vrot.lane.b32.xlu0 %v82, 96
    %v91 = vpop.permute.xlu0 %90
    %94 = vst.msk [vmem:[#allocation8] sm:$0xff] %vm54, %v89
    %95 = vst.msk [vmem:[#allocation8 + $0x8] sm:$0xff] %vm54, %v91
    %96 = vrot.lane.b32.xlu0 %v79, 64
    %v97 = vpop.permute.xlu0 %96
    %98 = vrot.lane.b32.xlu0 %v82, 64
    %v99 = vpop.permute.xlu0 %98
    %102 = vst.msk [vmem:[#allocation10] sm:$0xff] %vm54, %v97
    %103 = vst.msk [vmem:[#allocation10 + $0x8] sm:$0xff] %vm54, %v99
    // Predicated region
    $region18: #{tpu_custom_call.1} parent=1 // pred_check
      _
    $region19: #{tpu_custom_call.1} parent=1 // pred_check_branch
      %105 = sbr.rel (0) target = $region21
    $region20: #{tpu_custom_call.1} parent=1 // pred_region
      %107 = vsyncadd [#allocation4], 0
      %s108 = sshll.u32 [#allocation7], 4
      %s109 = int_to_ptr.vmem [resolvable:$true] %s108
      %s110 = sshll.u32 %s2, 4
      %s111 = int_to_ptr.hbm [resolvable:$true] %s110
      %116 = dma.vmem_to_hbm [thread:$0]  %s109, 256, %s111, [#allocation4], 128, 128, 8
    $region21: #{tpu_custom_call.1} parent=1 // pred_fallthru
      _
    // Predicated region
    $region22: #{tpu_custom_call.1} parent=1 // pred_check
      _
    $region23: #{tpu_custom_call.1} parent=1 // pred_check_branch
      %118 = sbr.rel (0) target = $region25
    $region24: #{tpu_custom_call.1} parent=1 // pred_region
      %120 = vsyncadd [#allocation9], 0
      %s121 = sshll.u32 [#allocation8], 4
      %s122 = int_to_ptr.vmem [resolvable:$true] %s121
      %s123 = sshll.u32 %s3, 4
      %s124 = int_to_ptr.hbm [resolvable:$true] %s123
      %129 = dma.vmem_to_hbm [thread:$0]  %s122, 256, %s124, [#allocation9], 128, 128, 8
    $region25: #{tpu_custom_call.1} parent=1 // pred_fallthru
      _
    // Predicated region
    $region26: #{tpu_custom_call.1} parent=1 // pred_check
      _
    $region27: #{tpu_custom_call.1} parent=1 // pred_check_branch
      %131 = sbr.rel (0) target = $region29
    $region28: #{tpu_custom_call.1} parent=1 // pred_region
      %133 = vsyncadd [#allocation9], 0
      %s134 = sshll.u32 [#allocation10], 4
      %s135 = int_to_ptr.vmem [resolvable:$true] %s134
      %s136 = sshll.u32 %s4, 4
      %s137 = int_to_ptr.hbm [resolvable:$true] %s136
      %142 = dma.vmem_to_hbm [thread:$0]  %s135, 256, %s137, [#allocation9], 128, 128, 8
    $region29: #{tpu_custom_call.1} parent=1 // pred_fallthru
      _
    // Predicated region
    $region30: #{tpu_custom_call.1} parent=1 // pred_check
      _
    $region31: #{tpu_custom_call.1} parent=1 // pred_check_branch
      %144 = sbr.rel (0) target = $region33
    $region32: #{tpu_custom_call.1} parent=1 // pred_region
      %146 = dma.done [#allocation4], 256
    $region33: #{tpu_custom_call.1} parent=1 // pred_fallthru
      _
    // Predicated region
    $region34: #{tpu_custom_call.1} parent=1 // pred_check
      _
    $region35: #{tpu_custom_call.1} parent=1 // pred_check_branch
      %148 = sbr.rel (0) target = $region37
    $region36: #{tpu_custom_call.1} parent=1 // pred_region
      %150 = dma.done [#allocation9], 256
    $region37: #{tpu_custom_call.1} parent=1 // pred_fallthru
      _
    // Predicated region
    $region38: #{tpu_custom_call.1} parent=1 // pred_check
      _
    $region39: #{tpu_custom_call.1} parent=1 // pred_check_branch
      %152 = sbr.rel (0) target = $region41
    $region40: #{tpu_custom_call.1} parent=1 // pred_region
      %154 = dma.done [#allocation9], 256
    $region41: #{tpu_custom_call.1} parent=1 // pred_fallthru
      _
    %155 = vsyncpa [#allocation3], 1
    %156 = vsyncpa [#allocation6], 1
    %157 = vsyncpa [#allocation4], 1
    %158 = vsyncpa [#allocation9], 1

</llo_original>
